<compile_context>
chip_gen: v5e
topology: v5e:2x2
jax: 0.10.0
libtpu: 0.0.40
codegen_flags: <defaults>
</compile_context>

<pallas_src>
import jax
import jax.numpy as jnp
from jax import lax
from jax.experimental import pallas as pl
from jax.experimental.pallas import tpu as pltpu


def _round_up(x: int, m: int) -> int:
    return (x + m - 1) // m * m


def _sublane_multiple(dtype) -> int:
    # 8 sublanes of 32-bit; sub-32-bit dtypes pack along sublanes.
    return max(8, 32 // jnp.dtype(dtype).itemsize)


def _linear_kernel(scales_ref, x_ref, w_ref, b_ref, o_ref, *acc_scratch):
    # scales_ref : SMEM (2,) f32  -> [w_mul, b_mul]
    # x_ref      : (tm, tk) activations
    # w_ref      : (tn, tk) weight in native (N, K) layout
    # b_ref      : (1, tn)  f32 bias row
    # o_ref      : (tm, tn) output (resident across the K grid axis)
    # acc_scratch: optional (tm, tn) f32 scratch; when absent we accumulate
    #              directly into the f32 output block.
    acc_ref = acc_scratch[0] if acc_scratch else o_ref
    k = pl.program_id(2)

    @pl.when(k == 0)
    def _():
        acc_ref[...] = jnp.zeros_like(acc_ref)

    # Contract x's K with weight's K (transposed-RHS matmul, MXU-native).
    acc_ref[...] += lax.dot_general(
        x_ref[...], w_ref[...],
        dimension_numbers=(((1,), (1,)), ((), ())),
        preferred_element_type=jnp.float32)

    @pl.when(k == pl.num_programs(2) - 1)
    def _():
        w_mul = scales_ref[0]
        b_mul = scales_ref[1]
        out = acc_ref[...] * w_mul + b_ref[...] * b_mul  # (1, tn) broadcasts
        o_ref[...] = out.astype(o_ref.dtype)


def custom_linear(x, weight, bias=None, *, w_mul=1.0, b_mul=1.0,
                  tm=512, tn=512, tk=512, compute_dtype=None):
    """PyTorch CustomLinear.forward: F.linear(x, weight * w_mul, bias * b_mul).

    x: (..., K), weight: (N, K), bias: (N,) or None. Returns (..., N).
    compute_dtype: optional narrow dtype (e.g. jnp.bfloat16) for the matmul
    operands; accumulation is always float32.
    """
    *lead, K = x.shape
    N, K_w = weight.shape
    assert K == K_w, "weight/input feature mismatch"

    out_dtype = x.dtype
    x2 = x.reshape(-1, K)
    M = x2.shape[0]

    cdt = jnp.dtype(compute_dtype) if compute_dtype is not None else jnp.dtype(x.dtype)
    sub = _sublane_multiple(cdt)

    # Clip tile sizes to the (padded) problem so every block divides exactly:
    # sublane axis multiple of `sub`, lane axis multiple of 128.
    tm = min(tm, _round_up(M, sub))
    tn = min(tn, _round_up(N, 128))
    tk = min(tk, _round_up(K, 128))
    M_pad, N_pad, K_pad = _round_up(M, tm), _round_up(N, tn), _round_up(K, tk)

    # Only pad / cast when actually required (avoid extra HBM round-trips).
    x_p = x2
    if M_pad != M or K_pad != K:
        x_p = jnp.pad(x_p, ((0, M_pad - M), (0, K_pad - K)))
    w_p = weight
    if N_pad != N or K_pad != K:
        w_p = jnp.pad(w_p, ((0, N_pad - N), (0, K_pad - K)))
    if x_p.dtype != cdt:
        x_p = x_p.astype(cdt)
    if w_p.dtype != cdt:
        w_p = w_p.astype(cdt)

    if bias is None:
        b_p = jnp.zeros((1, N_pad), jnp.float32)
        b_mul = 0.0
    else:
        b = bias.astype(jnp.float32)
        if N_pad != N:
            b = jnp.pad(b, (0, N_pad - N))
        b_p = b.reshape(1, N_pad)

    # Scales live in SMEM: one compiled kernel regardless of (w_mul, b_mul).
    scales = jnp.array([w_mul, b_mul], dtype=jnp.float32)

    grid = (M_pad // tm, N_pad // tn, K_pad // tk)

    # f32 outputs: accumulate directly into the resident output block (saves a
    # (tm, tn) VMEM tile and the finalize copy). Narrow outputs: f32 scratch.
    use_acc_scratch = jnp.dtype(out_dtype) != jnp.dtype(jnp.float32)
    scratch_shapes = [pltpu.VMEM((tm, tn), jnp.float32)] if use_acc_scratch else []

    op_bytes = jnp.dtype(cdt).itemsize
    cost = pl.CostEstimate(
        flops=2 * M_pad * N_pad * K_pad,
        transcendentals=0,
        bytes_accessed=(op_bytes * (M_pad * K_pad + N_pad * K_pad)
                        + 4 * N_pad
                        + jnp.dtype(out_dtype).itemsize * M_pad * N_pad),
    )

    out_p = pl.pallas_call(
        _linear_kernel,
        out_shape=jax.ShapeDtypeStruct((M_pad, N_pad), out_dtype),
        grid_spec=pltpu.PrefetchScalarGridSpec(
            num_scalar_prefetch=0,
            grid=grid,
            in_specs=[
                pl.BlockSpec(memory_space=pltpu.MemorySpace.SMEM),    # scales
                pl.BlockSpec((tm, tk), lambda i, j, k: (i, k)),       # x tile
                pl.BlockSpec((tn, tk), lambda i, j, k: (j, k)),       # W (N,K) tile
                pl.BlockSpec((1, tn), lambda i, j, k: (0, j)),        # bias tile
            ],
            out_specs=pl.BlockSpec((tm, tn), lambda i, j, k: (i, j)),
            scratch_shapes=scratch_shapes,
        ),
        compiler_params=pltpu.CompilerParams(
            dimension_semantics=("parallel", "parallel", "arbitrary"),
            vmem_limit_bytes=48 * 1024 * 1024,   # safe on v7x (64 MiB/TC), raises v5e's 16 MiB default
        ),
        cost_estimate=cost,
    )(scales, x_p, w_p, b_p)

    out = out_p
    if M_pad != M or N_pad != N:
        out = out[:M, :N]
    return out.reshape(*lead, N)


if __name__ == "__main__":
    key = jax.random.PRNGKey(0)
    k_x, k_w, k_b = jax.random.split(key, 3)

    # Module hyper-params (matching CustomLinear.__init__)
    input_size, output_size = 32, 64
    gain, lrmul = 2.0 ** 0.5, 0.5
    he_std = gain * input_size ** (-0.5)
    init_std = he_std / lrmul
    w_mul = lrmul
    b_mul = lrmul

    # Deterministic small inputs: batch=2, seq=8, hidden=32 -> out 64
    x = jax.random.normal(k_x, (2, 8, input_size), dtype=jnp.float32)
    weight = jax.random.normal(k_w, (output_size, input_size),
                               dtype=jnp.float32) * init_std
    bias = jax.random.normal(k_b, (output_size,), dtype=jnp.float32)

    # With bias
    y = custom_linear(x, weight, bias, w_mul=w_mul, b_mul=b_mul)
    jax.block_until_ready(y)
    ref = x @ (weight * w_mul).T + bias * b_mul
    assert y.shape == (2, 8, output_size)
    assert jnp.max(jnp.abs(y - ref)) < 1e-4

    # Without bias (bias=False path of the module)
    y2 = custom_linear(x, weight, None, w_mul=w_mul)
    jax.block_until_ready(y2)
    ref2 = x @ (weight * w_mul).T
    assert jnp.max(jnp.abs(y2 - ref2)) < 1e-4

    print("KERNEL_OK")
</pallas_src>

<mosaic_0001>
module attributes {stable_mosaic.version = 11 : i64} {
  func.func @_linear_kernel(%arg0: i32, %arg1: i32, %arg2: i32, %arg3: memref<2xf32, #tpu.memory_space<smem>>, %arg4: memref<16x128xf32, #tpu.memory_space<vmem>>, %arg5: memref<128x128xf32, #tpu.memory_space<vmem>>, %arg6: memref<1x128xf32, #tpu.memory_space<vmem>>, %arg7: memref<16x128xf32, #tpu.memory_space<vmem>>) attributes {dimension_semantics = [#tpu.dimension_semantics<parallel>, #tpu.dimension_semantics<parallel>, #tpu.dimension_semantics<arbitrary>], iteration_bounds = array<i64: 1, 1, 1>, scalar_prefetch = 0 : i64, scratch_operands = 0 : i64, tpu.core_type = #tpu.core_type<tc>, window_params = [{transform_indices = @transform_0, window_bounds = array<i64: 2>}, {transform_indices = @transform_1, window_bounds = array<i64: 16, 128>}, {transform_indices = @transform_2, window_bounds = array<i64: 128, 128>}, {transform_indices = @transform_3, window_bounds = array<i64: 1, 128>}, {transform_indices = @transform_4, window_bounds = array<i64: 16, 128>}]} {
    %c0_i32 = arith.constant 0 : i32
    %0 = arith.cmpi eq, %arg2, %c0_i32 : i32
    %1 = arith.extui %0 : i1 to i32
    %c0_i32_0 = arith.constant 0 : i32
    %2 = arith.cmpi ne, %1, %c0_i32_0 : i32
    scf.if %2 {
      %cst_10 = arith.constant 0.000000e+00 : f32
      %12 = vector.broadcast %cst_10 : f32 to vector<16x128xf32>
      %c0_11 = arith.constant 0 : index
      %c0_12 = arith.constant 0 : index
      %13 = vector.load %arg7[%c0_11, %c0_12] : memref<16x128xf32, #tpu.memory_space<vmem>>, vector<16x128xf32>
      tpu.vector_store %arg7[%c0_11, %c0_12], %12 {strides = array<i32>} : memref<16x128xf32, #tpu.memory_space<vmem>>, vector<16x128xf32>,
    } else {
    }
    %c0 = arith.constant 0 : index
    %c0_1 = arith.constant 0 : index
    %3 = vector.load %arg7[%c0, %c0_1] : memref<16x128xf32, #tpu.memory_space<vmem>>, vector<16x128xf32>
    %c0_2 = arith.constant 0 : index
    %c0_3 = arith.constant 0 : index
    %4 = vector.load %arg4[%c0_2, %c0_3] : memref<16x128xf32, #tpu.memory_space<vmem>>, vector<16x128xf32>
    %c0_4 = arith.constant 0 : index
    %c0_5 = arith.constant 0 : index
    %5 = vector.load %arg5[%c0_4, %c0_5] : memref<128x128xf32, #tpu.memory_space<vmem>>, vector<128x128xf32>
    %cst = arith.constant dense<0.000000e+00> : vector<16x128xf32>
    %6 = tpu.matmul %4, %5, %cst {dimension_numbers = #tpu.dot_dimension_numbers<[1], [1], [0], [0], [0, 0, 1, 0], [], []>} : vector<16x128xf32>, vector<128x128xf32>, vector<16x128xf32> -> vector<16x128xf32>
    %7 = arith.addf %3, %6 : vector<16x128xf32>
    %c0_6 = arith.constant 0 : index
    %c0_7 = arith.constant 0 : index
    %8 = vector.load %arg7[%c0_6, %c0_7] : memref<16x128xf32, #tpu.memory_space<vmem>>, vector<16x128xf32>
    tpu.vector_store %arg7[%c0_6, %c0_7], %7 {strides = array<i32>} : memref<16x128xf32, #tpu.memory_space<vmem>>, vector<16x128xf32>,
    %c0_i32_8 = arith.constant 0 : i32
    %9 = arith.cmpi eq, %arg2, %c0_i32_8 : i32
    %10 = arith.extui %9 : i1 to i32
    %c0_i32_9 = arith.constant 0 : i32
    %11 = arith.cmpi ne, %10, %c0_i32_9 : i32
    scf.if %11 {
      %c0_10 = arith.constant 0 : index
      %12 = memref.load %arg3[%c0_10] : memref<2xf32, #tpu.memory_space<smem>>
      %c1 = arith.constant 1 : index
      %13 = memref.load %arg3[%c1] : memref<2xf32, #tpu.memory_space<smem>>
      %c0_11 = arith.constant 0 : index
      %c0_12 = arith.constant 0 : index
      %14 = vector.load %arg7[%c0_11, %c0_12] : memref<16x128xf32, #tpu.memory_space<vmem>>, vector<16x128xf32>
      %15 = vector.broadcast %12 : f32 to vector<16x128xf32>
      %16 = arith.mulf %14, %15 : vector<16x128xf32>
      %c0_13 = arith.constant 0 : index
      %c0_14 = arith.constant 0 : index
      %17 = vector.load %arg6[%c0_13, %c0_14] : memref<1x128xf32, #tpu.memory_space<vmem>>, vector<1x128xf32>
      %18 = vector.broadcast %13 : f32 to vector<1x128xf32>
      %19 = arith.mulf %17, %18 : vector<1x128xf32>
      %20 = vector.broadcast %19 : vector<1x128xf32> to vector<16x128xf32>
      %21 = arith.addf %16, %20 : vector<16x128xf32>
      %c0_15 = arith.constant 0 : index
      %c0_16 = arith.constant 0 : index
      %22 = vector.load %arg7[%c0_15, %c0_16] : memref<16x128xf32, #tpu.memory_space<vmem>>, vector<16x128xf32>
      tpu.vector_store %arg7[%c0_15, %c0_16], %21 {strides = array<i32>} : memref<16x128xf32, #tpu.memory_space<vmem>>, vector<16x128xf32>,
    } else {
    }
    return
  }
  func.func @transform_0(%arg0: i32, %arg1: i32, %arg2: i32) -> i32 {
    %c0_i32 = arith.constant 0 : i32
    %c0_i32_0 = arith.constant 0 : i32
    return %c0_i32 : i32
  }
  func.func @transform_1(%arg0: i32, %arg1: i32, %arg2: i32) -> (i32, i32) {
    %c0_i32 = arith.constant 0 : i32
    return %arg0, %arg2 : i32, i32
  }
  func.func @transform_2(%arg0: i32, %arg1: i32, %arg2: i32) -> (i32, i32) {
    %c0_i32 = arith.constant 0 : i32
    return %arg1, %arg2 : i32, i32
  }
  func.func @transform_3(%arg0: i32, %arg1: i32, %arg2: i32) -> (i32, i32) {
    %c0_i32 = arith.constant 0 : i32
    %c0_i32_0 = arith.constant 0 : i32
    return %c0_i32, %arg1 : i32, i32
  }
  func.func @transform_4(%arg0: i32, %arg1: i32, %arg2: i32) -> (i32, i32) {
    %c0_i32 = arith.constant 0 : i32
    return %arg0, %arg1 : i32, i32
  }
}

</mosaic_0001>

<llo_original>
// kernel: tpu_custom_call.1
$region0: #{tpu_custom_call.1}
  #allocation0 [shape = 'u32[]', space=smem, size = 0x4, offset = 0x4, fixed_abs, tag = 'smem constant byte address 0x4 - core index']
  #allocation1 [shape = 'u32[72,128]{1,0:T(1,128)}', space=vmem, size = 0x9000, scoped, tag = 'internal scratch']
  %s0 = inlined_call_operand.hbm [shape: f32[2], index: 0, kind: input, shape index: {}]
  %s1 = inlined_call_operand.hbm [shape: f32[16,128], index: 1, kind: input, shape index: {}]
  %s2 = inlined_call_operand.hbm [shape: f32[128,128], index: 2, kind: input, shape index: {}]
  %s3 = inlined_call_operand.vmem [shape: f32[1,128], index: 3, kind: input, shape index: {}]
  %s4 = inlined_call_operand.hbm [shape: f32[16,128], index: 4, kind: output, shape index: {}]
  %s5 = sld [smem:[#allocation0]]
  $region46: #{tpu_custom_call.1} parent=0
    _
  %s7 = ssub.s32 1, %s5
  %s8 = scalar_select 0, %s7, %s5
  $region1: #{tpu_custom_call.1} parent=0
    #allocation2 [shape = 'u8[512]{0}', space=smem, size = 0x200, scoped, tag = 'input window, operand 0, single buffered']
    #allocation3 [shape = 's32[1]{0}', space=sflag, size = 0x4, scoped, tag = 'scoped memory for tpu_custom_call.1']
    #allocation4 [shape = 's32[1]{0}', space=sflag, size = 0x4, scoped, tag = 'scoped memory for tpu_custom_call.1']
    #allocation5 [shape = 's32[1]{0}', space=sflag, size = 0x4, scoped, tag = 'scoped memory for tpu_custom_call.1']
    #allocation6 [shape = 'u8[8192]{0}', space=vmem, size = 0x2000, scoped, tag = 'input window, operand 1, single buffered']
    #allocation7 [shape = 'u8[65536]{0}', space=vmem, size = 0x10000, scoped, tag = 'input window, operand 2, single buffered']
    #allocation8 [shape = 's32[1]{0}', space=sflag, size = 0x4, scoped, tag = 'scoped memory for tpu_custom_call.1']
    #allocation9 [shape = 'u8[8192]{0}', space=vmem, size = 0x2000, scoped, tag = 'output window, operand 0, single buffered']
    %9 = vsyncpa [#allocation5], 0
    %10 = vsyncpa [#allocation3], 0
    %11 = vsyncpa [#allocation8], 0
    %12 = vsyncpa [#allocation4], 0
    // Predicated region
    $region2: #{tpu_custom_call.1} parent=1 // pred_check
      _
    $region3: #{tpu_custom_call.1} parent=1 // pred_check_branch
      %14 = sbr.rel (0) target = $region5
    $region4: #{tpu_custom_call.1} parent=1 // pred_region
      %16 = vsyncadd [#allocation5], 0
      %s18 = sshll.u32 %s0, 4
      %s19 = int_to_ptr.hbm [resolvable:$true] %s18
      %21 = dma.hbm_to_smem %s19, 16, [#allocation2], [#allocation5]
    $region5: #{tpu_custom_call.1} parent=1 // pred_fallthru
      _
    // Predicated region
    $region6: #{tpu_custom_call.1} parent=1 // pred_check
      _
    $region7: #{tpu_custom_call.1} parent=1 // pred_check_branch
      %23 = sbr.rel (0) target = $region9
    $region8: #{tpu_custom_call.1} parent=1 // pred_region
      %25 = vsyncadd [#allocation3], 0
      %s26 = sshll.u32 %s1, 4
      %s27 = int_to_ptr.hbm [resolvable:$true] %s26
      %s28 = sshll.u32 [#allocation6], 4
      %s29 = int_to_ptr.vmem [resolvable:$true] %s28
      %34 = dma.hbm_to_vmem [thread:$0]  %s27, 256, %s29, [#allocation3], 128, 128, 8
    $region9: #{tpu_custom_call.1} parent=1 // pred_fallthru
      _
    // Predicated region
    $region10: #{tpu_custom_call.1} parent=1 // pred_check
      _
    $region11: #{tpu_custom_call.1} parent=1 // pred_check_branch
      %36 = sbr.rel (0) target = $region13
    $region12: #{tpu_custom_call.1} parent=1 // pred_region
      %38 = vsyncadd [#allocation8], 0
      %s39 = sshll.u32 %s2, 4
      %s40 = int_to_ptr.hbm [resolvable:$true] %s39
      %s41 = sshll.u32 [#allocation7], 4
      %s42 = int_to_ptr.vmem [resolvable:$true] %s41
      %47 = dma.hbm_to_vmem [thread:$0]  %s40, 2048, %s42, [#allocation8], 128, 128, 8
    $region13: #{tpu_custom_call.1} parent=1 // pred_fallthru
      _
    // Predicated region
    $region14: #{tpu_custom_call.1} parent=1 // pred_check
      _
    $region15: #{tpu_custom_call.1} parent=1 // pred_check_branch
      %49 = sbr.rel (0) target = $region17
    $region16: #{tpu_custom_call.1} parent=1 // pred_region
      _
    $region17: #{tpu_custom_call.1} parent=1 // pred_fallthru
      _
    // Predicated region
    $region18: #{tpu_custom_call.1} parent=1 // pred_check
      _
    $region19: #{tpu_custom_call.1} parent=1 // pred_check_branch
      %51 = sbr.rel (0) target = $region21
    $region20: #{tpu_custom_call.1} parent=1 // pred_region
      %53 = dma.done [#allocation5], 16
    $region21: #{tpu_custom_call.1} parent=1 // pred_fallthru
      _
    // Predicated region
    $region22: #{tpu_custom_call.1} parent=1 // pred_check
      _
    $region23: #{tpu_custom_call.1} parent=1 // pred_check_branch
      %55 = sbr.rel (0) target = $region25
    $region24: #{tpu_custom_call.1} parent=1 // pred_region
      %57 = dma.done [#allocation3], 256
    $region25: #{tpu_custom_call.1} parent=1 // pred_fallthru
      _
    // Predicated region
    $region26: #{tpu_custom_call.1} parent=1 // pred_check
      _
    $region27: #{tpu_custom_call.1} parent=1 // pred_check_branch
      %59 = sbr.rel (0) target = $region29
    $region28: #{tpu_custom_call.1} parent=1 // pred_region
      %61 = dma.done [#allocation8], 2048
    $region29: #{tpu_custom_call.1} parent=1 // pred_fallthru
      _
    %62 = sfence
    %p63 = scmp.eq.s32.totalorder 0, 0
    // Predicated region
    $region30: #{tpu_custom_call.1} parent=1 // pred_check
      %p64 = pneg %p63
    $region31: #{tpu_custom_call.1} parent=1 // pred_check_branch
      %66 = sbr.rel (%p64) target = $region33
    $region32: #{tpu_custom_call.1} parent=1 // pred_region
      %67 = vst [vmem:[#allocation9] sm:$0xff] 0.0
      %68 = vst [vmem:[#allocation9 + $0x8] sm:$0xff] 0.0
    $region33: #{tpu_custom_call.1} parent=1 // pred_fallthru
      _
    %v69 = vld [vmem:[#allocation9] sm:$0xff]
    %v70 = vld [vmem:[#allocation9 + $0x8] sm:$0xff]
    %v71 = vld [vmem:[#allocation6] sm:$0xff]
    %v72 = vld [vmem:[#allocation6 + $0x8] sm:$0xff]
    %v73 = vld [vmem:[#allocation7] sm:$0xff]
    %v74 = vld [vmem:[#allocation7 + $0x8] sm:$0xff]
    %v75 = vld [vmem:[#allocation7 + $0x10] sm:$0xff]
    %v76 = vld [vmem:[#allocation7 + $0x18] sm:$0xff]
    %v77 = vld [vmem:[#allocation7 + $0x20] sm:$0xff]
    %v78 = vld [vmem:[#allocation7 + $0x28] sm:$0xff]
    %v79 = vld [vmem:[#allocation7 + $0x30] sm:$0xff]
    %v80 = vld [vmem:[#allocation7 + $0x38] sm:$0xff]
    %v81 = vld [vmem:[#allocation7 + $0x40] sm:$0xff]
    %v82 = vld [vmem:[#allocation7 + $0x48] sm:$0xff]
    %v83 = vld [vmem:[#allocation7 + $0x50] sm:$0xff]
    %v84 = vld [vmem:[#allocation7 + $0x58] sm:$0xff]
    %v85 = vld [vmem:[#allocation7 + $0x60] sm:$0xff]
    %v86 = vld [vmem:[#allocation7 + $0x68] sm:$0xff]
    %v87 = vld [vmem:[#allocation7 + $0x70] sm:$0xff]
    %v88 = vld [vmem:[#allocation7 + $0x78] sm:$0xff]
    %89 = vmatpush.xpose.msra.mxu0 %v88
    %90 = vmatpush.xpose.msra.mxu0 %v87
    %91 = vmatpush.xpose.msra.mxu0 %v86
    %92 = vmatpush.xpose.msra.mxu0 %v85
    %93 = vmatpush.xpose.msra.mxu0 %v84
    %94 = vmatpush.xpose.msra.mxu0 %v83
    %95 = vmatpush.xpose.msra.mxu0 %v82
    %96 = vmatpush.xpose.msra.mxu0 %v81
    %97 = vmatpush.xpose.msra.mxu0 %v80
    %98 = vmatpush.xpose.msra.mxu0 %v79
    %99 = vmatpush.xpose.msra.mxu0 %v78
    %100 = vmatpush.xpose.msra.mxu0 %v77
    %101 = vmatpush.xpose.msra.mxu0 %v76
    %102 = vmatpush.xpose.msra.mxu0 %v75
    %103 = vmatpush.xpose.msra.mxu0 %v74
    %104 = vmatpush.xpose.msra.mxu0 %v73
    %105 = vmatmul.f32.gmra.mxu0 %v71
    %v106 = vpop.f32.mrf.mxu0
    %v107 = vadd.f32 0.0, %v106
    %108 = vmatmul.f32.gmra.mxu0 %v72
    %v109 = vpop.f32.mrf.mxu0
    %v110 = vadd.f32 0.0, %v109
    %111 = vdwg.mxu0
    %v112 = vadd.f32 %v69, %v107
    %v113 = vadd.f32 %v70, %v110
    %114 = vst [vmem:[#allocation9] sm:$0xff] %v112
    %115 = vst [vmem:[#allocation9 + $0x8] sm:$0xff] %v113
    // Predicated region
    $region34: #{tpu_custom_call.1} parent=1 // pred_check
      %p116 = pneg %p63
    $region35: #{tpu_custom_call.1} parent=1 // pred_check_branch
      %118 = sbr.rel (%p116) target = $region37
    $region36: #{tpu_custom_call.1} parent=1 // pred_region
      %s119 = sld [smem:[#allocation2]]
      %s120 = sld [smem:[#allocation2 + $0x1]]
      %v121 = vld [vmem:[#allocation9] sm:$0xff]
      %v122 = vld [vmem:[#allocation9 + $0x8] sm:$0xff]
      %v123 = vstv %s119
      %v124 = vmul.f32 %v121, %v123
      %v125 = vmul.f32 %v122, %v123
      %v126 = vld [vmem:[%s3] sm:$0x1]
      %v127 = vstv %s120
      %v128 = vmul.f32 %v126, %v127
      %v130 = vperm.slane %v128, 0
      %v132 = vadd.f32 %v124, %v130
      %v133 = vadd.f32 %v125, %v130
      %134 = vst [vmem:[#allocation9] sm:$0xff] %v132
      %135 = vst [vmem:[#allocation9 + $0x8] sm:$0xff] %v133
    $region37: #{tpu_custom_call.1} parent=1 // pred_fallthru
      _
    // Predicated region
    $region38: #{tpu_custom_call.1} parent=1 // pred_check
      _
    $region39: #{tpu_custom_call.1} parent=1 // pred_check_branch
      %137 = sbr.rel (0) target = $region41
    $region40: #{tpu_custom_call.1} parent=1 // pred_region
      %139 = vsyncadd [#allocation4], 0
      %s140 = sshll.u32 [#allocation9], 4
      %s141 = int_to_ptr.vmem [resolvable:$true] %s140
      %s142 = sshll.u32 %s4, 4
      %s143 = int_to_ptr.hbm [resolvable:$true] %s142
      %148 = dma.vmem_to_hbm [thread:$0]  %s141, 256, %s143, [#allocation4], 128, 128, 8
    $region41: #{tpu_custom_call.1} parent=1 // pred_fallthru
      _
    // Predicated region
    $region42: #{tpu_custom_call.1} parent=1 // pred_check
      _
    $region43: #{tpu_custom_call.1} parent=1 // pred_check_branch
      %150 = sbr.rel (0) target = $region45
    $region44: #{tpu_custom_call.1} parent=1 // pred_region
      %152 = dma.done [#allocation4], 256
    $region45: #{tpu_custom_call.1} parent=1 // pred_fallthru
      _
    %153 = vsyncpa [#allocation3], 1
    %154 = vsyncpa [#allocation8], 1
    %155 = vsyncpa [#allocation4], 1
    %156 = vsyncpa [#allocation5], 1

</llo_original>
